<compile_context>
chip_gen: v5e
topology: v5e:2x2
jax: 0.10.0
libtpu: 0.0.40
codegen_flags: <defaults>
</compile_context>

<pallas_src>
import jax
import jax.numpy as jnp
from jax.experimental import pallas as pl
from jax.experimental.pallas import tpu as pltpu


# ----------------------------- Fused kernel ---------------------------------

def _make_fused_kernel(T, Bp, n_layers):
    """RNN (n_layers, tanh) + Linear head + LogSoftmax, fully fused."""

    def kernel(*args):
        n_in = 1 + 3 * n_layers + 2          # x, per-layer (w_ih, w_hh, b), head (w, b)
        x_ref = args[0]
        layer_refs = args[1:1 + 3 * n_layers]
        w_out_ref = args[1 + 3 * n_layers]
        b_out_ref = args[2 + 3 * n_layers]
        o_ref = args[n_in]                   # (T*Bp, O) output

        x = x_ref[...]                        # (T*Bp, I), flattened in wrapper

        # Load every weight exactly once; all stay resident in vregs/VMEM.
        w_ih = [layer_refs[3 * l][...] for l in range(n_layers)]       # (in, H)
        w_hh = [layer_refs[3 * l + 1][...] for l in range(n_layers)]   # (H, H)
        bias = [layer_refs[3 * l + 2][...] for l in range(n_layers)]   # (1, H)
        w_out = w_out_ref[...]                                         # (H, O)
        b_out = b_out_ref[...]                                         # (1, O)

        H = w_hh[0].shape[0]

        # Layer-0 input projection has no sequential dependency -> hoist it
        # out of the recurrence as one big matmul.
        xw0 = jnp.dot(x, w_ih[0], preferred_element_type=jnp.float32) + bias[0]

        # Wavefront: at diagonal d, layer l runs time step t = d - l.  Layers
        # are visited deepest-first so layer l+1 consumes layer l's value from
        # the PREVIOUS diagonal before layer l overwrites it.  All h_t /
        # logits_t are SSA values (no scratch stores).
        h = [jnp.zeros((Bp, H), jnp.float32) for _ in range(n_layers)]
        logits_steps = [None] * T
        for d in range(T + n_layers - 1):          # static, fully unrolled
            for l in reversed(range(n_layers)):
                t = d - l
                if t < 0 or t >= T:
                    continue
                if l == 0:
                    # Sublane-aligned static slice (Bp is a multiple of 8).
                    pre = xw0[t * Bp:(t + 1) * Bp, :]
                else:
                    pre = (jnp.dot(h[l - 1], w_ih[l],
                                   preferred_element_type=jnp.float32)
                           + bias[l])
                pre = pre + jnp.dot(h[l], w_hh[l],
                                    preferred_element_type=jnp.float32)
                h[l] = jnp.tanh(pre)
                if l == n_layers - 1:
                    # Fused head: off the serial critical path, fills MXU
                    # slack while the recurrence waits on tanh/MXU latency.
                    logits_steps[t] = (
                        jnp.dot(h[l], w_out,
                                preferred_element_type=jnp.float32) + b_out)

        # Numerically stable LogSoftmax on the whole slab, single store.
        logits = jnp.concatenate(logits_steps, axis=0)       # (T*Bp, O)
        m = jnp.max(logits, axis=-1, keepdims=True)
        shifted = logits - m
        lse = jnp.log(jnp.sum(jnp.exp(shifted), axis=-1, keepdims=True))
        o_ref[...] = (shifted - lse).astype(o_ref.dtype)

    return kernel


# ------------------------------- Full model ---------------------------------

def init_params(key, input_size, hidden_size, n_layers, output_size):
    """Deterministic init mirroring PyTorch's uniform(-1/sqrt(H), 1/sqrt(H))."""
    params = {"rnn": []}
    k = 1.0 / jnp.sqrt(jnp.float32(hidden_size))
    for layer in range(n_layers):
        in_sz = input_size if layer == 0 else hidden_size
        key, k1, k2, k3, k4 = jax.random.split(key, 5)
        w_ih = jax.random.uniform(k1, (hidden_size, in_sz), jnp.float32, -k, k)
        w_hh = jax.random.uniform(k2, (hidden_size, hidden_size), jnp.float32, -k, k)
        b_ih = jax.random.uniform(k3, (hidden_size,), jnp.float32, -k, k)
        b_hh = jax.random.uniform(k4, (hidden_size,), jnp.float32, -k, k)
        params["rnn"].append({
            "w_ih_t": w_ih.T,                          # (in, H)
            "w_hh_t": w_hh.T,                          # (H, H)
            "bias": (b_ih + b_hh).reshape(1, hidden_size),
        })
    key, k5, k6 = jax.random.split(key, 3)
    w_out = jax.random.uniform(k5, (output_size, hidden_size), jnp.float32, -k, k)
    b_out = jax.random.uniform(k6, (output_size,), jnp.float32, -k, k)
    params["out_w_t"] = w_out.T                         # (H, O)
    params["out_b"] = b_out.reshape(1, output_size)
    return params


@jax.jit
def recurrent_model_forward(params, x):
    """x: (T, B, input_size) -> (T, B, output_size) log-probs."""
    T, B, I = x.shape
    n_layers = len(params["rnn"])
    H = params["rnn"][0]["w_hh_t"].shape[0]
    O = params["out_w_t"].shape[1]

    # Pad batch up to a full sublane group (multiple of 8) so every per-step
    # slice in the kernel is sublane-aligned, and flatten to 2D in the wrapper
    # (free in XLA; a relayout if done inside the kernel).
    Bp = ((max(B, 8) + 7) // 8) * 8
    if Bp != B:
        x = jnp.pad(x, ((0, 0), (0, Bp - B), (0, 0)))
    x2d = x.reshape(T * Bp, I)

    inputs = [x2d]
    in_specs = [pl.BlockSpec((T * Bp, I), lambda: (0, 0))]
    for lp in params["rnn"]:
        in_sz = lp["w_ih_t"].shape[0]
        inputs += [lp["w_ih_t"], lp["w_hh_t"], lp["bias"]]
        in_specs += [
            pl.BlockSpec((in_sz, H), lambda: (0, 0)),
            pl.BlockSpec((H, H), lambda: (0, 0)),
            pl.BlockSpec((1, H), lambda: (0, 0)),
        ]
    inputs += [params["out_w_t"], params["out_b"]]
    in_specs += [
        pl.BlockSpec((H, O), lambda: (0, 0)),
        pl.BlockSpec((1, O), lambda: (0, 0)),
    ]

    out_flat = pl.pallas_call(
        _make_fused_kernel(T, Bp, n_layers),
        out_shape=jax.ShapeDtypeStruct((T * Bp, O), jnp.float32),
        in_specs=in_specs,
        out_specs=pl.BlockSpec((T * Bp, O), lambda: (0, 0)),
    )(*inputs)
    # Drop the batch padding.
    return out_flat.reshape(T, Bp, O)[:, :B, :]


# Pure-JAX reference (matches PyTorch nn.RNN(tanh) + Linear + LogSoftmax).
def _reference(params, x):
    T, B, _ = x.shape
    h_seq = x
    for lp in params["rnn"]:
        H = lp["w_hh_t"].shape[0]
        h = jnp.zeros((B, H), jnp.float32)
        outs = []
        for t in range(T):
            h = jnp.tanh(h_seq[t] @ lp["w_ih_t"] + h @ lp["w_hh_t"] + lp["bias"])
            outs.append(h)
        h_seq = jnp.stack(outs, axis=0)
    logits = h_seq.reshape(T * B, -1) @ params["out_w_t"] + params["out_b"]
    return jax.nn.log_softmax(logits, axis=-1).reshape(T, B, -1)


if __name__ == "__main__":
    input_size, hidden_size, n_layers, output_size = 16, 32, 2, 16
    T, B = 8, 2

    key = jax.random.PRNGKey(0)
    key, kx = jax.random.split(key)
    x = jax.random.normal(kx, (T, B, input_size), jnp.float32)
    params = init_params(key, input_size, hidden_size, n_layers, output_size)

    out = recurrent_model_forward(params, x)
    out = jax.block_until_ready(out)

    ref = _reference(params, x)
    assert out.shape == (T, B, output_size)
    assert jnp.allclose(out, ref, atol=1e-5, rtol=1e-5)
    print("KERNEL_OK")
</pallas_src>

<mosaic_0001>
module attributes {stable_mosaic.version = 11 : i64} {
  func.func @kernel(%arg0: memref<64x16xf32, #tpu.memory_space<vmem>>, %arg1: memref<16x32xf32, #tpu.memory_space<vmem>>, %arg2: memref<32x32xf32, #tpu.memory_space<vmem>>, %arg3: memref<1x32xf32, #tpu.memory_space<vmem>>, %arg4: memref<32x32xf32, #tpu.memory_space<vmem>>, %arg5: memref<32x32xf32, #tpu.memory_space<vmem>>, %arg6: memref<1x32xf32, #tpu.memory_space<vmem>>, %arg7: memref<32x16xf32, #tpu.memory_space<vmem>>, %arg8: memref<1x16xf32, #tpu.memory_space<vmem>>, %arg9: memref<64x16xf32, #tpu.memory_space<vmem>>) attributes {dimension_semantics = [], scalar_prefetch = 0 : i64, scratch_operands = 0 : i64, tpu.core_type = #tpu.core_type<tc>} {
    %c0 = arith.constant 0 : index
    %c0_0 = arith.constant 0 : index
    %0 = vector.load %arg0[%c0, %c0_0] : memref<64x16xf32, #tpu.memory_space<vmem>>, vector<64x16xf32>
    %c0_1 = arith.constant 0 : index
    %c0_2 = arith.constant 0 : index
    %1 = vector.load %arg1[%c0_1, %c0_2] : memref<16x32xf32, #tpu.memory_space<vmem>>, vector<16x32xf32>
    %c0_3 = arith.constant 0 : index
    %c0_4 = arith.constant 0 : index
    %2 = vector.load %arg4[%c0_3, %c0_4] : memref<32x32xf32, #tpu.memory_space<vmem>>, vector<32x32xf32>
    %c0_5 = arith.constant 0 : index
    %c0_6 = arith.constant 0 : index
    %3 = vector.load %arg2[%c0_5, %c0_6] : memref<32x32xf32, #tpu.memory_space<vmem>>, vector<32x32xf32>
    %c0_7 = arith.constant 0 : index
    %c0_8 = arith.constant 0 : index
    %4 = vector.load %arg5[%c0_7, %c0_8] : memref<32x32xf32, #tpu.memory_space<vmem>>, vector<32x32xf32>
    %c0_9 = arith.constant 0 : index
    %c0_10 = arith.constant 0 : index
    %5 = vector.load %arg3[%c0_9, %c0_10] : memref<1x32xf32, #tpu.memory_space<vmem>>, vector<1x32xf32>
    %c0_11 = arith.constant 0 : index
    %c0_12 = arith.constant 0 : index
    %6 = vector.load %arg6[%c0_11, %c0_12] : memref<1x32xf32, #tpu.memory_space<vmem>>, vector<1x32xf32>
    %c0_13 = arith.constant 0 : index
    %c0_14 = arith.constant 0 : index
    %7 = vector.load %arg7[%c0_13, %c0_14] : memref<32x16xf32, #tpu.memory_space<vmem>>, vector<32x16xf32>
    %c0_15 = arith.constant 0 : index
    %c0_16 = arith.constant 0 : index
    %8 = vector.load %arg8[%c0_15, %c0_16] : memref<1x16xf32, #tpu.memory_space<vmem>>, vector<1x16xf32>
    %cst = arith.constant dense<0.000000e+00> : vector<64x32xf32>
    %9 = tpu.matmul %0, %1, %cst {dimension_numbers = #tpu.dot_dimension_numbers<[1], [0], [0], [1], [0, 0, 1, 1], [], []>} : vector<64x16xf32>, vector<16x32xf32>, vector<64x32xf32> -> vector<64x32xf32>
    %10 = vector.broadcast %5 : vector<1x32xf32> to vector<64x32xf32>
    %11 = arith.addf %9, %10 : vector<64x32xf32>
    %cst_17 = arith.constant 0.000000e+00 : f32
    %12 = vector.broadcast %cst_17 : f32 to vector<8x32xf32>
    %cst_18 = arith.constant 0.000000e+00 : f32
    %13 = vector.broadcast %cst_18 : f32 to vector<8x32xf32>
    %14 = vector.extract_strided_slice %11 {offsets = [0, 0], sizes = [8, 32], strides = [1, 1]} : vector<64x32xf32> to vector<8x32xf32>
    %cst_19 = arith.constant dense<0.000000e+00> : vector<8x32xf32>
    %15 = tpu.matmul %12, %3, %cst_19 {dimension_numbers = #tpu.dot_dimension_numbers<[1], [0], [0], [1], [0, 0, 1, 1], [], []>} : vector<8x32xf32>, vector<32x32xf32>, vector<8x32xf32> -> vector<8x32xf32>
    %16 = arith.addf %14, %15 : vector<8x32xf32>
    %17 = math.tanh %16 : vector<8x32xf32>
    %cst_20 = arith.constant dense<0.000000e+00> : vector<8x32xf32>
    %18 = tpu.matmul %17, %2, %cst_20 {dimension_numbers = #tpu.dot_dimension_numbers<[1], [0], [0], [1], [0, 0, 1, 1], [], []>} : vector<8x32xf32>, vector<32x32xf32>, vector<8x32xf32> -> vector<8x32xf32>
    %19 = vector.broadcast %6 : vector<1x32xf32> to vector<8x32xf32>
    %20 = arith.addf %18, %19 : vector<8x32xf32>
    %cst_21 = arith.constant dense<0.000000e+00> : vector<8x32xf32>
    %21 = tpu.matmul %13, %4, %cst_21 {dimension_numbers = #tpu.dot_dimension_numbers<[1], [0], [0], [1], [0, 0, 1, 1], [], []>} : vector<8x32xf32>, vector<32x32xf32>, vector<8x32xf32> -> vector<8x32xf32>
    %22 = arith.addf %20, %21 : vector<8x32xf32>
    %23 = math.tanh %22 : vector<8x32xf32>
    %cst_22 = arith.constant dense<0.000000e+00> : vector<8x16xf32>
    %24 = tpu.matmul %23, %7, %cst_22 {dimension_numbers = #tpu.dot_dimension_numbers<[1], [0], [0], [1], [0, 0, 1, 1], [], []>} : vector<8x32xf32>, vector<32x16xf32>, vector<8x16xf32> -> vector<8x16xf32>
    %25 = vector.broadcast %8 : vector<1x16xf32> to vector<8x16xf32>
    %26 = arith.addf %24, %25 : vector<8x16xf32>
    %27 = vector.extract_strided_slice %11 {offsets = [8, 0], sizes = [8, 32], strides = [1, 1]} : vector<64x32xf32> to vector<8x32xf32>
    %cst_23 = arith.constant dense<0.000000e+00> : vector<8x32xf32>
    %28 = tpu.matmul %17, %3, %cst_23 {dimension_numbers = #tpu.dot_dimension_numbers<[1], [0], [0], [1], [0, 0, 1, 1], [], []>} : vector<8x32xf32>, vector<32x32xf32>, vector<8x32xf32> -> vector<8x32xf32>
    %29 = arith.addf %27, %28 : vector<8x32xf32>
    %30 = math.tanh %29 : vector<8x32xf32>
    %cst_24 = arith.constant dense<0.000000e+00> : vector<8x32xf32>
    %31 = tpu.matmul %30, %2, %cst_24 {dimension_numbers = #tpu.dot_dimension_numbers<[1], [0], [0], [1], [0, 0, 1, 1], [], []>} : vector<8x32xf32>, vector<32x32xf32>, vector<8x32xf32> -> vector<8x32xf32>
    %32 = vector.broadcast %6 : vector<1x32xf32> to vector<8x32xf32>
    %33 = arith.addf %31, %32 : vector<8x32xf32>
    %cst_25 = arith.constant dense<0.000000e+00> : vector<8x32xf32>
    %34 = tpu.matmul %23, %4, %cst_25 {dimension_numbers = #tpu.dot_dimension_numbers<[1], [0], [0], [1], [0, 0, 1, 1], [], []>} : vector<8x32xf32>, vector<32x32xf32>, vector<8x32xf32> -> vector<8x32xf32>
    %35 = arith.addf %33, %34 : vector<8x32xf32>
    %36 = math.tanh %35 : vector<8x32xf32>
    %cst_26 = arith.constant dense<0.000000e+00> : vector<8x16xf32>
    %37 = tpu.matmul %36, %7, %cst_26 {dimension_numbers = #tpu.dot_dimension_numbers<[1], [0], [0], [1], [0, 0, 1, 1], [], []>} : vector<8x32xf32>, vector<32x16xf32>, vector<8x16xf32> -> vector<8x16xf32>
    %38 = vector.broadcast %8 : vector<1x16xf32> to vector<8x16xf32>
    %39 = arith.addf %37, %38 : vector<8x16xf32>
    %40 = vector.extract_strided_slice %11 {offsets = [16, 0], sizes = [8, 32], strides = [1, 1]} : vector<64x32xf32> to vector<8x32xf32>
    %cst_27 = arith.constant dense<0.000000e+00> : vector<8x32xf32>
    %41 = tpu.matmul %30, %3, %cst_27 {dimension_numbers = #tpu.dot_dimension_numbers<[1], [0], [0], [1], [0, 0, 1, 1], [], []>} : vector<8x32xf32>, vector<32x32xf32>, vector<8x32xf32> -> vector<8x32xf32>
    %42 = arith.addf %40, %41 : vector<8x32xf32>
    %43 = math.tanh %42 : vector<8x32xf32>
    %cst_28 = arith.constant dense<0.000000e+00> : vector<8x32xf32>
    %44 = tpu.matmul %43, %2, %cst_28 {dimension_numbers = #tpu.dot_dimension_numbers<[1], [0], [0], [1], [0, 0, 1, 1], [], []>} : vector<8x32xf32>, vector<32x32xf32>, vector<8x32xf32> -> vector<8x32xf32>
    %45 = vector.broadcast %6 : vector<1x32xf32> to vector<8x32xf32>
    %46 = arith.addf %44, %45 : vector<8x32xf32>
    %cst_29 = arith.constant dense<0.000000e+00> : vector<8x32xf32>
    %47 = tpu.matmul %36, %4, %cst_29 {dimension_numbers = #tpu.dot_dimension_numbers<[1], [0], [0], [1], [0, 0, 1, 1], [], []>} : vector<8x32xf32>, vector<32x32xf32>, vector<8x32xf32> -> vector<8x32xf32>
    %48 = arith.addf %46, %47 : vector<8x32xf32>
    %49 = math.tanh %48 : vector<8x32xf32>
    %cst_30 = arith.constant dense<0.000000e+00> : vector<8x16xf32>
    %50 = tpu.matmul %49, %7, %cst_30 {dimension_numbers = #tpu.dot_dimension_numbers<[1], [0], [0], [1], [0, 0, 1, 1], [], []>} : vector<8x32xf32>, vector<32x16xf32>, vector<8x16xf32> -> vector<8x16xf32>
    %51 = vector.broadcast %8 : vector<1x16xf32> to vector<8x16xf32>
    %52 = arith.addf %50, %51 : vector<8x16xf32>
    %53 = vector.extract_strided_slice %11 {offsets = [24, 0], sizes = [8, 32], strides = [1, 1]} : vector<64x32xf32> to vector<8x32xf32>
    %cst_31 = arith.constant dense<0.000000e+00> : vector<8x32xf32>
    %54 = tpu.matmul %43, %3, %cst_31 {dimension_numbers = #tpu.dot_dimension_numbers<[1], [0], [0], [1], [0, 0, 1, 1], [], []>} : vector<8x32xf32>, vector<32x32xf32>, vector<8x32xf32> -> vector<8x32xf32>
    %55 = arith.addf %53, %54 : vector<8x32xf32>
    %56 = math.tanh %55 : vector<8x32xf32>
    %cst_32 = arith.constant dense<0.000000e+00> : vector<8x32xf32>
    %57 = tpu.matmul %56, %2, %cst_32 {dimension_numbers = #tpu.dot_dimension_numbers<[1], [0], [0], [1], [0, 0, 1, 1], [], []>} : vector<8x32xf32>, vector<32x32xf32>, vector<8x32xf32> -> vector<8x32xf32>
    %58 = vector.broadcast %6 : vector<1x32xf32> to vector<8x32xf32>
    %59 = arith.addf %57, %58 : vector<8x32xf32>
    %cst_33 = arith.constant dense<0.000000e+00> : vector<8x32xf32>
    %60 = tpu.matmul %49, %4, %cst_33 {dimension_numbers = #tpu.dot_dimension_numbers<[1], [0], [0], [1], [0, 0, 1, 1], [], []>} : vector<8x32xf32>, vector<32x32xf32>, vector<8x32xf32> -> vector<8x32xf32>
    %61 = arith.addf %59, %60 : vector<8x32xf32>
    %62 = math.tanh %61 : vector<8x32xf32>
    %cst_34 = arith.constant dense<0.000000e+00> : vector<8x16xf32>
    %63 = tpu.matmul %62, %7, %cst_34 {dimension_numbers = #tpu.dot_dimension_numbers<[1], [0], [0], [1], [0, 0, 1, 1], [], []>} : vector<8x32xf32>, vector<32x16xf32>, vector<8x16xf32> -> vector<8x16xf32>
    %64 = vector.broadcast %8 : vector<1x16xf32> to vector<8x16xf32>
    %65 = arith.addf %63, %64 : vector<8x16xf32>
    %66 = vector.extract_strided_slice %11 {offsets = [32, 0], sizes = [8, 32], strides = [1, 1]} : vector<64x32xf32> to vector<8x32xf32>
    %cst_35 = arith.constant dense<0.000000e+00> : vector<8x32xf32>
    %67 = tpu.matmul %56, %3, %cst_35 {dimension_numbers = #tpu.dot_dimension_numbers<[1], [0], [0], [1], [0, 0, 1, 1], [], []>} : vector<8x32xf32>, vector<32x32xf32>, vector<8x32xf32> -> vector<8x32xf32>
    %68 = arith.addf %66, %67 : vector<8x32xf32>
    %69 = math.tanh %68 : vector<8x32xf32>
    %cst_36 = arith.constant dense<0.000000e+00> : vector<8x32xf32>
    %70 = tpu.matmul %69, %2, %cst_36 {dimension_numbers = #tpu.dot_dimension_numbers<[1], [0], [0], [1], [0, 0, 1, 1], [], []>} : vector<8x32xf32>, vector<32x32xf32>, vector<8x32xf32> -> vector<8x32xf32>
    %71 = vector.broadcast %6 : vector<1x32xf32> to vector<8x32xf32>
    %72 = arith.addf %70, %71 : vector<8x32xf32>
    %cst_37 = arith.constant dense<0.000000e+00> : vector<8x32xf32>
    %73 = tpu.matmul %62, %4, %cst_37 {dimension_numbers = #tpu.dot_dimension_numbers<[1], [0], [0], [1], [0, 0, 1, 1], [], []>} : vector<8x32xf32>, vector<32x32xf32>, vector<8x32xf32> -> vector<8x32xf32>
    %74 = arith.addf %72, %73 : vector<8x32xf32>
    %75 = math.tanh %74 : vector<8x32xf32>
    %cst_38 = arith.constant dense<0.000000e+00> : vector<8x16xf32>
    %76 = tpu.matmul %75, %7, %cst_38 {dimension_numbers = #tpu.dot_dimension_numbers<[1], [0], [0], [1], [0, 0, 1, 1], [], []>} : vector<8x32xf32>, vector<32x16xf32>, vector<8x16xf32> -> vector<8x16xf32>
    %77 = vector.broadcast %8 : vector<1x16xf32> to vector<8x16xf32>
    %78 = arith.addf %76, %77 : vector<8x16xf32>
    %79 = vector.extract_strided_slice %11 {offsets = [40, 0], sizes = [8, 32], strides = [1, 1]} : vector<64x32xf32> to vector<8x32xf32>
    %cst_39 = arith.constant dense<0.000000e+00> : vector<8x32xf32>
    %80 = tpu.matmul %69, %3, %cst_39 {dimension_numbers = #tpu.dot_dimension_numbers<[1], [0], [0], [1], [0, 0, 1, 1], [], []>} : vector<8x32xf32>, vector<32x32xf32>, vector<8x32xf32> -> vector<8x32xf32>
    %81 = arith.addf %79, %80 : vector<8x32xf32>
    %82 = math.tanh %81 : vector<8x32xf32>
    %cst_40 = arith.constant dense<0.000000e+00> : vector<8x32xf32>
    %83 = tpu.matmul %82, %2, %cst_40 {dimension_numbers = #tpu.dot_dimension_numbers<[1], [0], [0], [1], [0, 0, 1, 1], [], []>} : vector<8x32xf32>, vector<32x32xf32>, vector<8x32xf32> -> vector<8x32xf32>
    %84 = vector.broadcast %6 : vector<1x32xf32> to vector<8x32xf32>
    %85 = arith.addf %83, %84 : vector<8x32xf32>
    %cst_41 = arith.constant dense<0.000000e+00> : vector<8x32xf32>
    %86 = tpu.matmul %75, %4, %cst_41 {dimension_numbers = #tpu.dot_dimension_numbers<[1], [0], [0], [1], [0, 0, 1, 1], [], []>} : vector<8x32xf32>, vector<32x32xf32>, vector<8x32xf32> -> vector<8x32xf32>
    %87 = arith.addf %85, %86 : vector<8x32xf32>
    %88 = math.tanh %87 : vector<8x32xf32>
    %cst_42 = arith.constant dense<0.000000e+00> : vector<8x16xf32>
    %89 = tpu.matmul %88, %7, %cst_42 {dimension_numbers = #tpu.dot_dimension_numbers<[1], [0], [0], [1], [0, 0, 1, 1], [], []>} : vector<8x32xf32>, vector<32x16xf32>, vector<8x16xf32> -> vector<8x16xf32>
    %90 = vector.broadcast %8 : vector<1x16xf32> to vector<8x16xf32>
    %91 = arith.addf %89, %90 : vector<8x16xf32>
    %92 = vector.extract_strided_slice %11 {offsets = [48, 0], sizes = [8, 32], strides = [1, 1]} : vector<64x32xf32> to vector<8x32xf32>
    %cst_43 = arith.constant dense<0.000000e+00> : vector<8x32xf32>
    %93 = tpu.matmul %82, %3, %cst_43 {dimension_numbers = #tpu.dot_dimension_numbers<[1], [0], [0], [1], [0, 0, 1, 1], [], []>} : vector<8x32xf32>, vector<32x32xf32>, vector<8x32xf32> -> vector<8x32xf32>
    %94 = arith.addf %92, %93 : vector<8x32xf32>
    %95 = math.tanh %94 : vector<8x32xf32>
    %cst_44 = arith.constant dense<0.000000e+00> : vector<8x32xf32>
    %96 = tpu.matmul %95, %2, %cst_44 {dimension_numbers = #tpu.dot_dimension_numbers<[1], [0], [0], [1], [0, 0, 1, 1], [], []>} : vector<8x32xf32>, vector<32x32xf32>, vector<8x32xf32> -> vector<8x32xf32>
    %97 = vector.broadcast %6 : vector<1x32xf32> to vector<8x32xf32>
    %98 = arith.addf %96, %97 : vector<8x32xf32>
    %cst_45 = arith.constant dense<0.000000e+00> : vector<8x32xf32>
    %99 = tpu.matmul %88, %4, %cst_45 {dimension_numbers = #tpu.dot_dimension_numbers<[1], [0], [0], [1], [0, 0, 1, 1], [], []>} : vector<8x32xf32>, vector<32x32xf32>, vector<8x32xf32> -> vector<8x32xf32>
    %100 = arith.addf %98, %99 : vector<8x32xf32>
    %101 = math.tanh %100 : vector<8x32xf32>
    %cst_46 = arith.constant dense<0.000000e+00> : vector<8x16xf32>
    %102 = tpu.matmul %101, %7, %cst_46 {dimension_numbers = #tpu.dot_dimension_numbers<[1], [0], [0], [1], [0, 0, 1, 1], [], []>} : vector<8x32xf32>, vector<32x16xf32>, vector<8x16xf32> -> vector<8x16xf32>
    %103 = vector.broadcast %8 : vector<1x16xf32> to vector<8x16xf32>
    %104 = arith.addf %102, %103 : vector<8x16xf32>
    %105 = vector.extract_strided_slice %11 {offsets = [56, 0], sizes = [8, 32], strides = [1, 1]} : vector<64x32xf32> to vector<8x32xf32>
    %cst_47 = arith.constant dense<0.000000e+00> : vector<8x32xf32>
    %106 = tpu.matmul %95, %3, %cst_47 {dimension_numbers = #tpu.dot_dimension_numbers<[1], [0], [0], [1], [0, 0, 1, 1], [], []>} : vector<8x32xf32>, vector<32x32xf32>, vector<8x32xf32> -> vector<8x32xf32>
    %107 = arith.addf %105, %106 : vector<8x32xf32>
    %108 = math.tanh %107 : vector<8x32xf32>
    %cst_48 = arith.constant dense<0.000000e+00> : vector<8x32xf32>
    %109 = tpu.matmul %108, %2, %cst_48 {dimension_numbers = #tpu.dot_dimension_numbers<[1], [0], [0], [1], [0, 0, 1, 1], [], []>} : vector<8x32xf32>, vector<32x32xf32>, vector<8x32xf32> -> vector<8x32xf32>
    %110 = vector.broadcast %6 : vector<1x32xf32> to vector<8x32xf32>
    %111 = arith.addf %109, %110 : vector<8x32xf32>
    %cst_49 = arith.constant dense<0.000000e+00> : vector<8x32xf32>
    %112 = tpu.matmul %101, %4, %cst_49 {dimension_numbers = #tpu.dot_dimension_numbers<[1], [0], [0], [1], [0, 0, 1, 1], [], []>} : vector<8x32xf32>, vector<32x32xf32>, vector<8x32xf32> -> vector<8x32xf32>
    %113 = arith.addf %111, %112 : vector<8x32xf32>
    %114 = math.tanh %113 : vector<8x32xf32>
    %cst_50 = arith.constant dense<0.000000e+00> : vector<8x16xf32>
    %115 = tpu.matmul %114, %7, %cst_50 {dimension_numbers = #tpu.dot_dimension_numbers<[1], [0], [0], [1], [0, 0, 1, 1], [], []>} : vector<8x32xf32>, vector<32x16xf32>, vector<8x16xf32> -> vector<8x16xf32>
    %116 = vector.broadcast %8 : vector<1x16xf32> to vector<8x16xf32>
    %117 = arith.addf %115, %116 : vector<8x16xf32>
    %118 = tpu.concatenate %26, %39, %52, %65, %78, %91, %104, %117 in 0 : vector<8x16xf32>, vector<8x16xf32>, vector<8x16xf32>, vector<8x16xf32>, vector<8x16xf32>, vector<8x16xf32>, vector<8x16xf32>, vector<8x16xf32> -> vector<64x16xf32>
    %cst_51 = arith.constant dense<0xFF800000> : vector<64xf32>
    %119 = vector.multi_reduction <maximumf>, %118, %cst_51 [1] : vector<64x16xf32> to vector<64xf32>
    %120 = vector.shape_cast %119 : vector<64xf32> to vector<64x1xf32>
    %121 = vector.broadcast %120 : vector<64x1xf32> to vector<64x16xf32>
    %122 = arith.subf %118, %121 : vector<64x16xf32>
    %123 = math.exp %122 : vector<64x16xf32>
    %cst_52 = arith.constant dense<0.000000e+00> : vector<64xf32>
    %124 = vector.multi_reduction <add>, %123, %cst_52 [1] : vector<64x16xf32> to vector<64xf32>
    %125 = vector.shape_cast %124 : vector<64xf32> to vector<64x1xf32>
    %126 = math.log %125 : vector<64x1xf32>
    %127 = vector.broadcast %126 : vector<64x1xf32> to vector<64x16xf32>
    %128 = arith.subf %122, %127 : vector<64x16xf32>
    %c0_53 = arith.constant 0 : index
    %c0_54 = arith.constant 0 : index
    %129 = vector.load %arg9[%c0_53, %c0_54] : memref<64x16xf32, #tpu.memory_space<vmem>>, vector<64x16xf32>
    tpu.vector_store %arg9[%c0_53, %c0_54], %128 {strides = array<i32>} : memref<64x16xf32, #tpu.memory_space<vmem>>, vector<64x16xf32>,
    return
  }
}

</mosaic_0001>

<llo_original>
// kernel: recurrent_model_forward.1
$region0: #{recurrent_model_forward.1}
  #allocation0 [shape = 'u32[]', space=smem, size = 0x4, offset = 0x4, fixed_abs, tag = 'smem constant byte address 0x4 - core index']
  #allocation1 [shape = 'u32[72,128]{1,0:T(1,128)}', space=vmem, size = 0x9000, scoped, tag = 'internal scratch']
  %s0 = inlined_call_operand.vmem [shape: f32[64,16], index: 0, kind: input, shape index: {}]
  %s1 = inlined_call_operand.vmem [shape: f32[16,32], index: 1, kind: input, shape index: {}]
  %s2 = inlined_call_operand.vmem [shape: f32[32,32], index: 2, kind: input, shape index: {}]
  %s3 = inlined_call_operand.vmem [shape: f32[1,32], index: 3, kind: input, shape index: {}]
  %s4 = inlined_call_operand.vmem [shape: f32[32,32], index: 4, kind: input, shape index: {}]
  %s5 = inlined_call_operand.vmem [shape: f32[32,32], index: 5, kind: input, shape index: {}]
  %s6 = inlined_call_operand.vmem [shape: f32[1,32], index: 6, kind: input, shape index: {}]
  %s7 = inlined_call_operand.vmem [shape: f32[32,16], index: 7, kind: input, shape index: {}]
  %s8 = inlined_call_operand.hbm [shape: f32[1,16], index: 8, kind: input, shape index: {}]
  %s9 = inlined_call_operand.vmem [shape: f32[64,16], index: 9, kind: output, shape index: {}]
  %s10 = sld [smem:[#allocation0]]
  $region50: #{recurrent_model_forward.1} parent=0
    _
  %s12 = ssub.s32 1, %s10
  %s13 = scalar_select 0, %s12, %s10
  $region1: #{recurrent_model_forward.1} parent=0
    #allocation2 [shape = 'u8[512]{0}', space=vmem, size = 0x400, scoped, tag = 'input window, operand 8, single buffered']
    #allocation3 [shape = 's32[1]{0}', space=sflag, size = 0x4, scoped, tag = 'scoped memory for recurrent_model_forward.1']
    %14 = vsyncpa [#allocation3], 0
    // Predicated region
    $region2: #{recurrent_model_forward.1} parent=1 // pred_check
      _
    $region3: #{recurrent_model_forward.1} parent=1 // pred_check_branch
      %16 = sbr.rel (0) target = $region5
    $region4: #{recurrent_model_forward.1} parent=1 // pred_region
      _
    $region5: #{recurrent_model_forward.1} parent=1 // pred_fallthru
      _
    // Predicated region
    $region6: #{recurrent_model_forward.1} parent=1 // pred_check
      _
    $region7: #{recurrent_model_forward.1} parent=1 // pred_check_branch
      %18 = sbr.rel (0) target = $region9
    $region8: #{recurrent_model_forward.1} parent=1 // pred_region
      _
    $region9: #{recurrent_model_forward.1} parent=1 // pred_fallthru
      _
    // Predicated region
    $region10: #{recurrent_model_forward.1} parent=1 // pred_check
      _
    $region11: #{recurrent_model_forward.1} parent=1 // pred_check_branch
      %20 = sbr.rel (0) target = $region13
    $region12: #{recurrent_model_forward.1} parent=1 // pred_region
      _
    $region13: #{recurrent_model_forward.1} parent=1 // pred_fallthru
      _
    // Predicated region
    $region14: #{recurrent_model_forward.1} parent=1 // pred_check
      _
    $region15: #{recurrent_model_forward.1} parent=1 // pred_check_branch
      %22 = sbr.rel (0) target = $region17
    $region16: #{recurrent_model_forward.1} parent=1 // pred_region
      _
    $region17: #{recurrent_model_forward.1} parent=1 // pred_fallthru
      _
    // Predicated region
    $region18: #{recurrent_model_forward.1} parent=1 // pred_check
      _
    $region19: #{recurrent_model_forward.1} parent=1 // pred_check_branch
      %24 = sbr.rel (0) target = $region21
    $region20: #{recurrent_model_forward.1} parent=1 // pred_region
      _
    $region21: #{recurrent_model_forward.1} parent=1 // pred_fallthru
      _
    // Predicated region
    $region22: #{recurrent_model_forward.1} parent=1 // pred_check
      _
    $region23: #{recurrent_model_forward.1} parent=1 // pred_check_branch
      %26 = sbr.rel (0) target = $region25
    $region24: #{recurrent_model_forward.1} parent=1 // pred_region
      _
    $region25: #{recurrent_model_forward.1} parent=1 // pred_fallthru
      _
    // Predicated region
    $region26: #{recurrent_model_forward.1} parent=1 // pred_check
      _
    $region27: #{recurrent_model_forward.1} parent=1 // pred_check_branch
      %28 = sbr.rel (0) target = $region29
    $region28: #{recurrent_model_forward.1} parent=1 // pred_region
      _
    $region29: #{recurrent_model_forward.1} parent=1 // pred_fallthru
      _
    // Predicated region
    $region30: #{recurrent_model_forward.1} parent=1 // pred_check
      _
    $region31: #{recurrent_model_forward.1} parent=1 // pred_check_branch
      %30 = sbr.rel (0) target = $region33
    $region32: #{recurrent_model_forward.1} parent=1 // pred_region
      _
    $region33: #{recurrent_model_forward.1} parent=1 // pred_fallthru
      _
    // Predicated region
    $region34: #{recurrent_model_forward.1} parent=1 // pred_check
      _
    $region35: #{recurrent_model_forward.1} parent=1 // pred_check_branch
      %32 = sbr.rel (0) target = $region37
    $region36: #{recurrent_model_forward.1} parent=1 // pred_region
      %34 = vsyncadd [#allocation3], 0
      %s36 = sshll.u32 %s8, 4
      %s37 = int_to_ptr.hbm [resolvable:$true] %s36
      %s38 = sshll.u32 [#allocation2], 4
      %s39 = int_to_ptr.vmem [resolvable:$true] %s38
      %41 = dma.hbm_to_vmem [thread:$0]  %s37, 16, %s39, [#allocation3]
    $region37: #{recurrent_model_forward.1} parent=1 // pred_fallthru
      _
    // Predicated region
    $region38: #{recurrent_model_forward.1} parent=1 // pred_check
      _
    $region39: #{recurrent_model_forward.1} parent=1 // pred_check_branch
      %43 = sbr.rel (0) target = $region41
    $region40: #{recurrent_model_forward.1} parent=1 // pred_region
      %45 = dma.done [#allocation3], 16
    $region41: #{recurrent_model_forward.1} parent=1 // pred_fallthru
      _
    %v46 = vld [vmem:[%s0] sm:$0xff]
    %v47 = vld [vmem:[%s0 + $0x8] sm:$0xff]
    %v48 = vld [vmem:[%s0 + $0x10] sm:$0xff]
    %v49 = vld [vmem:[%s0 + $0x18] sm:$0xff]
    %v50 = vld [vmem:[%s0 + $0x20] sm:$0xff]
    %v51 = vld [vmem:[%s0 + $0x28] sm:$0xff]
    %v52 = vld [vmem:[%s0 + $0x30] sm:$0xff]
    %v53 = vld [vmem:[%s0 + $0x38] sm:$0xff]
    %v54 = vld [vmem:[%s1] sm:$0xff]
    %v55 = vld [vmem:[%s1 + $0x8] sm:$0xff]
    %v56 = vld [vmem:[%s4] sm:$0xff]
    %v57 = vld [vmem:[%s4 + $0x8] sm:$0xff]
    %v58 = vld [vmem:[%s4 + $0x10] sm:$0xff]
    %v59 = vld [vmem:[%s4 + $0x18] sm:$0xff]
    %v60 = vld [vmem:[%s2] sm:$0xff]
    %v61 = vld [vmem:[%s2 + $0x8] sm:$0xff]
    %v62 = vld [vmem:[%s2 + $0x10] sm:$0xff]
    %v63 = vld [vmem:[%s2 + $0x18] sm:$0xff]
    %v64 = vld [vmem:[%s5] sm:$0xff]
    %v65 = vld [vmem:[%s5 + $0x8] sm:$0xff]
    %v66 = vld [vmem:[%s5 + $0x10] sm:$0xff]
    %v67 = vld [vmem:[%s5 + $0x18] sm:$0xff]
    %v68 = vld [vmem:[%s3] sm:$0x1]
    %v69 = vld [vmem:[%s6] sm:$0x1]
    %v70 = vld [vmem:[%s7] sm:$0xff]
    %v71 = vld [vmem:[%s7 + $0x8] sm:$0xff]
    %v72 = vld [vmem:[%s7 + $0x10] sm:$0xff]
    %v73 = vld [vmem:[%s7 + $0x18] sm:$0xff]
    %v74 = vld [vmem:[#allocation2] sm:$0x1]
    %v76 = vperm.slane %v68, 0
    %vm78 = vcmask 130048
    %v80 = vsel %vm78, %v46, 0
    %v83 = vsel %vm78, %v47, 0
    %v86 = vsel %vm78, %v48, 0
    %v89 = vsel %vm78, %v49, 0
    %v92 = vsel %vm78, %v50, 0
    %v95 = vsel %vm78, %v51, 0
    %v98 = vsel %vm78, %v52, 0
    %v101 = vsel %vm78, %v53, 0
    %103 = vmatpush.msra.mxu0 0.0
    %104 = vmatpush.msra.mxu0 0.0
    %105 = vmatpush.msra.mxu0 0.0
    %106 = vmatpush.msra.mxu0 0.0
    %107 = vmatpush.msra.mxu0 0.0
    %108 = vmatpush.msra.mxu0 0.0
    %109 = vmatpush.msra.mxu0 0.0
    %110 = vmatpush.msra.mxu0 0.0
    %111 = vmatpush.msra.mxu0 0.0
    %112 = vmatpush.msra.mxu0 0.0
    %113 = vmatpush.msra.mxu0 0.0
    %114 = vmatpush.msra.mxu0 0.0
    %115 = vmatpush.msra.mxu0 0.0
    %116 = vmatpush.msra.mxu0 0.0
    %117 = vmatpush.msra.mxu0 %v55
    %118 = vmatpush.msra.mxu0 %v54
    %119 = vmatmul.f32.gmra.mxu0 %v80
    %v120 = vpop.f32.mrf.mxu0
    %v121 = vadd.f32 %v76, %v120
    %122 = vmatmul.f32.gmra.mxu0 %v83
    %v123 = vpop.f32.mrf.mxu0
    %v124 = vadd.f32 %v76, %v123
    %125 = vmatmul.f32.gmra.mxu0 %v86
    %v126 = vpop.f32.mrf.mxu0
    %v127 = vadd.f32 %v76, %v126
    %128 = vmatmul.f32.gmra.mxu0 %v89
    %v129 = vpop.f32.mrf.mxu0
    %v130 = vadd.f32 %v76, %v129
    %131 = vmatmul.f32.gmra.mxu0 %v92
    %v132 = vpop.f32.mrf.mxu0
    %v133 = vadd.f32 %v76, %v132
    %134 = vmatmul.f32.gmra.mxu0 %v95
    %v135 = vpop.f32.mrf.mxu0
    %v136 = vadd.f32 %v76, %v135
    %137 = vmatmul.f32.gmra.mxu0 %v98
    %v138 = vpop.f32.mrf.mxu0
    %v139 = vadd.f32 %v76, %v138
    %140 = vmatmul.f32.gmra.mxu0 %v101
    %v141 = vpop.f32.mrf.mxu0
    %v142 = vadd.f32 %v76, %v141
    %143 = vdwg.mxu0
    %vm144 = vcmask 261120
    %v146 = vsel %vm144, 0.0, 0
    %148 = vmatpush.msra.mxu0 0.0
    %149 = vmatpush.msra.mxu0 0.0
    %150 = vmatpush.msra.mxu0 0.0
    %151 = vmatpush.msra.mxu0 0.0
    %152 = vmatpush.msra.mxu0 0.0
    %153 = vmatpush.msra.mxu0 0.0
    %154 = vmatpush.msra.mxu0 0.0
    %155 = vmatpush.msra.mxu0 0.0
    %156 = vmatpush.msra.mxu0 0.0
    %157 = vmatpush.msra.mxu0 0.0
    %158 = vmatpush.msra.mxu0 0.0
    %159 = vmatpush.msra.mxu0 0.0
    %160 = vmatpush.msra.mxu0 %v63
    %161 = vmatpush.msra.mxu0 %v62
    %162 = vmatpush.msra.mxu0 %v61
    %163 = vmatpush.msra.mxu0 %v60
    %164 = vmatmul.f32.gmra.mxu0 %v146
    %v165 = vpop.f32.mrf.mxu0
    %v166 = vadd.f32 0.0, %v165
    %167 = vdwg.mxu0
    %v168 = vadd.f32 %v121, %v166
    %v169 = vtanh.pop %v168
    %v171 = vperm.slane %v69, 0
    %v174 = vsel %vm144, %v169, 0
    %176 = vmatpush.msra.mxu0 0.0
    %177 = vmatpush.msra.mxu0 0.0
    %178 = vmatpush.msra.mxu0 0.0
    %179 = vmatpush.msra.mxu0 0.0
    %180 = vmatpush.msra.mxu0 0.0
    %181 = vmatpush.msra.mxu0 0.0
    %182 = vmatpush.msra.mxu0 0.0
    %183 = vmatpush.msra.mxu0 0.0
    %184 = vmatpush.msra.mxu0 0.0
    %185 = vmatpush.msra.mxu0 0.0
    %186 = vmatpush.msra.mxu0 0.0
    %187 = vmatpush.msra.mxu0 0.0
    %188 = vmatpush.msra.mxu0 %v59
    %189 = vmatpush.msra.mxu0 %v58
    %190 = vmatpush.msra.mxu0 %v57
    %191 = vmatpush.msra.mxu0 %v56
    %192 = vmatmul.f32.gmra.mxu0 %v174
    %v193 = vpop.f32.mrf.mxu0
    %v194 = vadd.f32 %v171, %v193
    %195 = vdwg.mxu0
    %196 = vmatpush.msra.mxu0 0.0
    %197 = vmatpush.msra.mxu0 0.0
    %198 = vmatpush.msra.mxu0 0.0
    %199 = vmatpush.msra.mxu0 0.0
    %200 = vmatpush.msra.mxu0 0.0
    %201 = vmatpush.msra.mxu0 0.0
    %202 = vmatpush.msra.mxu0 0.0
    %203 = vmatpush.msra.mxu0 0.0
    %204 = vmatpush.msra.mxu0 0.0
    %205 = vmatpush.msra.mxu0 0.0
    %206 = vmatpush.msra.mxu0 0.0
    %207 = vmatpush.msra.mxu0 0.0
    %208 = vmatpush.msra.mxu0 %v67
    %209 = vmatpush.msra.mxu0 %v66
    %210 = vmatpush.msra.mxu0 %v65
    %211 = vmatpush.msra.mxu0 %v64
    %212 = vmatmul.f32.gmra.mxu0 %v146
    %v213 = vpop.f32.mrf.mxu0
    %v214 = vadd.f32 0.0, %v213
    %215 = vdwg.mxu0
    %v216 = vadd.f32 %v194, %v214
    %v217 = vtanh.pop %v216
    %v219 = vperm.slane %v74, 0
    %v222 = vsel %vm144, %v217, 0
    %224 = vmatpush.msra.mxu0 0.0
    %225 = vmatpush.msra.mxu0 0.0
    %226 = vmatpush.msra.mxu0 0.0
    %227 = vmatpush.msra.mxu0 0.0
    %228 = vmatpush.msra.mxu0 0.0
    %229 = vmatpush.msra.mxu0 0.0
    %230 = vmatpush.msra.mxu0 0.0
    %231 = vmatpush.msra.mxu0 0.0
    %232 = vmatpush.msra.mxu0 0.0
    %233 = vmatpush.msra.mxu0 0.0
    %234 = vmatpush.msra.mxu0 0.0
    %235 = vmatpush.msra.mxu0 0.0
    %236 = vmatpush.msra.mxu0 %v73
    %237 = vmatpush.msra.mxu0 %v72
    %238 = vmatpush.msra.mxu0 %v71
    %239 = vmatpush.msra.mxu0 %v70
    %240 = vmatmul.f32.gmra.mxu0 %v222
    %v241 = vpop.f32.mrf.mxu0
    %v242 = vadd.f32 %v219, %v241
    %243 = vdwg.mxu0
    %244 = vmatpush.msra.mxu0 0.0
    %245 = vmatpush.msra.mxu0 0.0
    %246 = vmatpush.msra.mxu0 0.0
    %247 = vmatpush.msra.mxu0 0.0
    %248 = vmatpush.msra.mxu0 0.0
    %249 = vmatpush.msra.mxu0 0.0
    %250 = vmatpush.msra.mxu0 0.0
    %251 = vmatpush.msra.mxu0 0.0
    %252 = vmatpush.msra.mxu0 0.0
    %253 = vmatpush.msra.mxu0 0.0
    %254 = vmatpush.msra.mxu0 0.0
    %255 = vmatpush.msra.mxu0 0.0
    %256 = vmatpush.msra.mxu0 %v63
    %257 = vmatpush.msra.mxu0 %v62
    %258 = vmatpush.msra.mxu0 %v61
    %259 = vmatpush.msra.mxu0 %v60
    %260 = vmatmul.f32.gmra.mxu0 %v174
    %v261 = vpop.f32.mrf.mxu0
    %v262 = vadd.f32 0.0, %v261
    %263 = vdwg.mxu0
    %v264 = vadd.f32 %v124, %v262
    %v265 = vtanh.pop %v264
    %v267 = vsel %vm144, %v265, 0
    %269 = vmatpush.msra.mxu0 0.0
    %270 = vmatpush.msra.mxu0 0.0
    %271 = vmatpush.msra.mxu0 0.0
    %272 = vmatpush.msra.mxu0 0.0
    %273 = vmatpush.msra.mxu0 0.0
    %274 = vmatpush.msra.mxu0 0.0
    %275 = vmatpush.msra.mxu0 0.0
    %276 = vmatpush.msra.mxu0 0.0
    %277 = vmatpush.msra.mxu0 0.0
    %278 = vmatpush.msra.mxu0 0.0
    %279 = vmatpush.msra.mxu0 0.0
    %280 = vmatpush.msra.mxu0 0.0
    %281 = vmatpush.msra.mxu0 %v59
    %282 = vmatpush.msra.mxu0 %v58
    %283 = vmatpush.msra.mxu0 %v57
    %284 = vmatpush.msra.mxu0 %v56
    %285 = vmatmul.f32.gmra.mxu0 %v267
    %v286 = vpop.f32.mrf.mxu0
    %v287 = vadd.f32 %v171, %v286
    %288 = vdwg.mxu0
    %289 = vmatpush.msra.mxu0 0.0
    %290 = vmatpush.msra.mxu0 0.0
    %291 = vmatpush.msra.mxu0 0.0
    %292 = vmatpush.msra.mxu0 0.0
    %293 = vmatpush.msra.mxu0 0.0
    %294 = vmatpush.msra.mxu0 0.0
    %295 = vmatpush.msra.mxu0 0.0
    %296 = vmatpush.msra.mxu0 0.0
    %297 = vmatpush.msra.mxu0 0.0
    %298 = vmatpush.msra.mxu0 0.0
    %299 = vmatpush.msra.mxu0 0.0
    %300 = vmatpush.msra.mxu0 0.0
    %301 = vmatpush.msra.mxu0 %v67
    %302 = vmatpush.msra.mxu0 %v66
    %303 = vmatpush.msra.mxu0 %v65
    %304 = vmatpush.msra.mxu0 %v64
    %305 = vmatmul.f32.gmra.mxu0 %v222
    %v306 = vpop.f32.mrf.mxu0
    %v307 = vadd.f32 0.0, %v306
    %308 = vdwg.mxu0
    %v309 = vadd.f32 %v287, %v307
    %v310 = vtanh.pop %v309
    %v312 = vsel %vm144, %v310, 0
    %314 = vmatpush.msra.mxu0 0.0
    %315 = vmatpush.msra.mxu0 0.0
    %316 = vmatpush.msra.mxu0 0.0
    %317 = vmatpush.msra.mxu0 0.0
    %318 = vmatpush.msra.mxu0 0.0
    %319 = vmatpush.msra.mxu0 0.0
    %320 = vmatpush.msra.mxu0 0.0
    %321 = vmatpush.msra.mxu0 0.0
    %322 = vmatpush.msra.mxu0 0.0
    %323 = vmatpush.msra.mxu0 0.0
    %324 = vmatpush.msra.mxu0 0.0
    %325 = vmatpush.msra.mxu0 0.0
    %326 = vmatpush.msra.mxu0 %v73
    %327 = vmatpush.msra.mxu0 %v72
    %328 = vmatpush.msra.mxu0 %v71
    %329 = vmatpush.msra.mxu0 %v70
    %330 = vmatmul.f32.gmra.mxu0 %v312
    %v331 = vpop.f32.mrf.mxu0
    %v332 = vadd.f32 %v219, %v331
    %333 = vdwg.mxu0
    %334 = vmatpush.msra.mxu0 0.0
    %335 = vmatpush.msra.mxu0 0.0
    %336 = vmatpush.msra.mxu0 0.0
    %337 = vmatpush.msra.mxu0 0.0
    %338 = vmatpush.msra.mxu0 0.0
    %339 = vmatpush.msra.mxu0 0.0
    %340 = vmatpush.msra.mxu0 0.0
    %341 = vmatpush.msra.mxu0 0.0
    %342 = vmatpush.msra.mxu0 0.0
    %343 = vmatpush.msra.mxu0 0.0
    %344 = vmatpush.msra.mxu0 0.0
    %345 = vmatpush.msra.mxu0 0.0
    %346 = vmatpush.msra.mxu0 %v63
    %347 = vmatpush.msra.mxu0 %v62
    %348 = vmatpush.msra.mxu0 %v61
    %349 = vmatpush.msra.mxu0 %v60
    %350 = vmatmul.f32.gmra.mxu0 %v267
    %v351 = vpop.f32.mrf.mxu0
    %v352 = vadd.f32 0.0, %v351
    %353 = vdwg.mxu0
    %v354 = vadd.f32 %v127, %v352
    %v355 = vtanh.pop %v354
    %v357 = vsel %vm144, %v355, 0
    %359 = vmatpush.msra.mxu0 0.0
    %360 = vmatpush.msra.mxu0 0.0
    %361 = vmatpush.msra.mxu0 0.0
    %362 = vmatpush.msra.mxu0 0.0
    %363 = vmatpush.msra.mxu0 0.0
    %364 = vmatpush.msra.mxu0 0.0
    %365 = vmatpush.msra.mxu0 0.0
    %366 = vmatpush.msra.mxu0 0.0
    %367 = vmatpush.msra.mxu0 0.0
    %368 = vmatpush.msra.mxu0 0.0
    %369 = vmatpush.msra.mxu0 0.0
    %370 = vmatpush.msra.mxu0 0.0
    %371 = vmatpush.msra.mxu0 %v59
    %372 = vmatpush.msra.mxu0 %v58
    %373 = vmatpush.msra.mxu0 %v57
    %374 = vmatpush.msra.mxu0 %v56
    %375 = vmatmul.f32.gmra.mxu0 %v357
    %v376 = vpop.f32.mrf.mxu0
    %v377 = vadd.f32 %v171, %v376
    %378 = vdwg.mxu0
    %379 = vmatpush.msra.mxu0 0.0
    %380 = vmatpush.msra.mxu0 0.0
    %381 = vmatpush.msra.mxu0 0.0
    %382 = vmatpush.msra.mxu0 0.0
    %383 = vmatpush.msra.mxu0 0.0
    %384 = vmatpush.msra.mxu0 0.0
    %385 = vmatpush.msra.mxu0 0.0
    %386 = vmatpush.msra.mxu0 0.0
    %387 = vmatpush.msra.mxu0 0.0
    %388 = vmatpush.msra.mxu0 0.0
    %389 = vmatpush.msra.mxu0 0.0
    %390 = vmatpush.msra.mxu0 0.0
    %391 = vmatpush.msra.mxu0 %v67
    %392 = vmatpush.msra.mxu0 %v66
    %393 = vmatpush.msra.mxu0 %v65
    %394 = vmatpush.msra.mxu0 %v64
    %395 = vmatmul.f32.gmra.mxu0 %v312
    %v396 = vpop.f32.mrf.mxu0
    %v397 = vadd.f32 0.0, %v396
    %398 = vdwg.mxu0
    %v399 = vadd.f32 %v377, %v397
    %v400 = vtanh.pop %v399
    %v402 = vsel %vm144, %v400, 0
    %404 = vmatpush.msra.mxu0 0.0
    %405 = vmatpush.msra.mxu0 0.0
    %406 = vmatpush.msra.mxu0 0.0
    %407 = vmatpush.msra.mxu0 0.0
    %408 = vmatpush.msra.mxu0 0.0
    %409 = vmatpush.msra.mxu0 0.0
    %410 = vmatpush.msra.mxu0 0.0
    %411 = vmatpush.msra.mxu0 0.0
    %412 = vmatpush.msra.mxu0 0.0
    %413 = vmatpush.msra.mxu0 0.0
    %414 = vmatpush.msra.mxu0 0.0
    %415 = vmatpush.msra.mxu0 0.0
    %416 = vmatpush.msra.mxu0 %v73
    %417 = vmatpush.msra.mxu0 %v72
    %418 = vmatpush.msra.mxu0 %v71
    %419 = vmatpush.msra.mxu0 %v70
    %420 = vmatmul.f32.gmra.mxu0 %v402
    %v421 = vpop.f32.mrf.mxu0
    %v422 = vadd.f32 %v219, %v421
    %423 = vdwg.mxu0
    %424 = vmatpush.msra.mxu0 0.0
    %425 = vmatpush.msra.mxu0 0.0
    %426 = vmatpush.msra.mxu0 0.0
    %427 = vmatpush.msra.mxu0 0.0
    %428 = vmatpush.msra.mxu0 0.0
    %429 = vmatpush.msra.mxu0 0.0
    %430 = vmatpush.msra.mxu0 0.0
    %431 = vmatpush.msra.mxu0 0.0
    %432 = vmatpush.msra.mxu0 0.0
    %433 = vmatpush.msra.mxu0 0.0
    %434 = vmatpush.msra.mxu0 0.0
    %435 = vmatpush.msra.mxu0 0.0
    %436 = vmatpush.msra.mxu0 %v63
    %437 = vmatpush.msra.mxu0 %v62
    %438 = vmatpush.msra.mxu0 %v61
    %439 = vmatpush.msra.mxu0 %v60
    %440 = vmatmul.f32.gmra.mxu0 %v357
    %v441 = vpop.f32.mrf.mxu0
    %v442 = vadd.f32 0.0, %v441
    %443 = vdwg.mxu0
    %v444 = vadd.f32 %v130, %v442
    %v445 = vtanh.pop %v444
    %v447 = vsel %vm144, %v445, 0
    %449 = vmatpush.msra.mxu0 0.0
    %450 = vmatpush.msra.mxu0 0.0
    %451 = vmatpush.msra.mxu0 0.0
    %452 = vmatpush.msra.mxu0 0.0
    %453 = vmatpush.msra.mxu0 0.0
    %454 = vmatpush.msra.mxu0 0.0
    %455 = vmatpush.msra.mxu0 0.0
    %456 = vmatpush.msra.mxu0 0.0
    %457 = vmatpush.msra.mxu0 0.0
    %458 = vmatpush.msra.mxu0 0.0
    %459 = vmatpush.msra.mxu0 0.0
    %460 = vmatpush.msra.mxu0 0.0
    %461 = vmatpush.msra.mxu0 %v59
    %462 = vmatpush.msra.mxu0 %v58
    %463 = vmatpush.msra.mxu0 %v57
    %464 = vmatpush.msra.mxu0 %v56
    %465 = vmatmul.f32.gmra.mxu0 %v447
    %v466 = vpop.f32.mrf.mxu0
    %v467 = vadd.f32 %v171, %v466
    %468 = vdwg.mxu0
    %469 = vmatpush.msra.mxu0 0.0
    %470 = vmatpush.msra.mxu0 0.0
    %471 = vmatpush.msra.mxu0 0.0
    %472 = vmatpush.msra.mxu0 0.0
    %473 = vmatpush.msra.mxu0 0.0
    %474 = vmatpush.msra.mxu0 0.0
    %475 = vmatpush.msra.mxu0 0.0
    %476 = vmatpush.msra.mxu0 0.0
    %477 = vmatpush.msra.mxu0 0.0
    %478 = vmatpush.msra.mxu0 0.0
    %479 = vmatpush.msra.mxu0 0.0
    %480 = vmatpush.msra.mxu0 0.0
    %481 = vmatpush.msra.mxu0 %v67
    %482 = vmatpush.msra.mxu0 %v66
    %483 = vmatpush.msra.mxu0 %v65
    %484 = vmatpush.msra.mxu0 %v64
    %485 = vmatmul.f32.gmra.mxu0 %v402
    %v486 = vpop.f32.mrf.mxu0
    %v487 = vadd.f32 0.0, %v486
    %488 = vdwg.mxu0
    %v489 = vadd.f32 %v467, %v487
    %v490 = vtanh.pop %v489
    %v492 = vsel %vm144, %v490, 0
    %494 = vmatpush.msra.mxu0 0.0
    %495 = vmatpush.msra.mxu0 0.0
    %496 = vmatpush.msra.mxu0 0.0
    %497 = vmatpush.msra.mxu0 0.0
    %498 = vmatpush.msra.mxu0 0.0
    %499 = vmatpush.msra.mxu0 0.0
    %500 = vmatpush.msra.mxu0 0.0
    %501 = vmatpush.msra.mxu0 0.0
    %502 = vmatpush.msra.mxu0 0.0
    %503 = vmatpush.msra.mxu0 0.0
    %504 = vmatpush.msra.mxu0 0.0
    %505 = vmatpush.msra.mxu0 0.0
    %506 = vmatpush.msra.mxu0 %v73
    %507 = vmatpush.msra.mxu0 %v72
    %508 = vmatpush.msra.mxu0 %v71
    %509 = vmatpush.msra.mxu0 %v70
    %510 = vmatmul.f32.gmra.mxu0 %v492
    %v511 = vpop.f32.mrf.mxu0
    %v512 = vadd.f32 %v219, %v511
    %513 = vdwg.mxu0
    %514 = vmatpush.msra.mxu0 0.0
    %515 = vmatpush.msra.mxu0 0.0
    %516 = vmatpush.msra.mxu0 0.0
    %517 = vmatpush.msra.mxu0 0.0
    %518 = vmatpush.msra.mxu0 0.0
    %519 = vmatpush.msra.mxu0 0.0
    %520 = vmatpush.msra.mxu0 0.0
    %521 = vmatpush.msra.mxu0 0.0
    %522 = vmatpush.msra.mxu0 0.0
    %523 = vmatpush.msra.mxu0 0.0
    %524 = vmatpush.msra.mxu0 0.0
    %525 = vmatpush.msra.mxu0 0.0
    %526 = vmatpush.msra.mxu0 %v63
    %527 = vmatpush.msra.mxu0 %v62
    %528 = vmatpush.msra.mxu0 %v61
    %529 = vmatpush.msra.mxu0 %v60
    %530 = vmatmul.f32.gmra.mxu0 %v447
    %v531 = vpop.f32.mrf.mxu0
    %v532 = vadd.f32 0.0, %v531
    %533 = vdwg.mxu0
    %v534 = vadd.f32 %v133, %v532
    %v535 = vtanh.pop %v534
    %v537 = vsel %vm144, %v535, 0
    %539 = vmatpush.msra.mxu0 0.0
    %540 = vmatpush.msra.mxu0 0.0
    %541 = vmatpush.msra.mxu0 0.0
    %542 = vmatpush.msra.mxu0 0.0
    %543 = vmatpush.msra.mxu0 0.0
    %544 = vmatpush.msra.mxu0 0.0
    %545 = vmatpush.msra.mxu0 0.0
    %546 = vmatpush.msra.mxu0 0.0
    %547 = vmatpush.msra.mxu0 0.0
    %548 = vmatpush.msra.mxu0 0.0
    %549 = vmatpush.msra.mxu0 0.0
    %550 = vmatpush.msra.mxu0 0.0
    %551 = vmatpush.msra.mxu0 %v59
    %552 = vmatpush.msra.mxu0 %v58
    %553 = vmatpush.msra.mxu0 %v57
    %554 = vmatpush.msra.mxu0 %v56
    %555 = vmatmul.f32.gmra.mxu0 %v537
    %v556 = vpop.f32.mrf.mxu0
    %v557 = vadd.f32 %v171, %v556
    %558 = vdwg.mxu0
    %559 = vmatpush.msra.mxu0 0.0
    %560 = vmatpush.msra.mxu0 0.0
    %561 = vmatpush.msra.mxu0 0.0
    %562 = vmatpush.msra.mxu0 0.0
    %563 = vmatpush.msra.mxu0 0.0
    %564 = vmatpush.msra.mxu0 0.0
    %565 = vmatpush.msra.mxu0 0.0
    %566 = vmatpush.msra.mxu0 0.0
    %567 = vmatpush.msra.mxu0 0.0
    %568 = vmatpush.msra.mxu0 0.0
    %569 = vmatpush.msra.mxu0 0.0
    %570 = vmatpush.msra.mxu0 0.0
    %571 = vmatpush.msra.mxu0 %v67
    %572 = vmatpush.msra.mxu0 %v66
    %573 = vmatpush.msra.mxu0 %v65
    %574 = vmatpush.msra.mxu0 %v64
    %575 = vmatmul.f32.gmra.mxu0 %v492
    %v576 = vpop.f32.mrf.mxu0
    %v577 = vadd.f32 0.0, %v576
    %578 = vdwg.mxu0
    %v579 = vadd.f32 %v557, %v577
    %v580 = vtanh.pop %v579
    %v582 = vsel %vm144, %v580, 0
    %584 = vmatpush.msra.mxu0 0.0
    %585 = vmatpush.msra.mxu0 0.0
    %586 = vmatpush.msra.mxu0 0.0
    %587 = vmatpush.msra.mxu0 0.0
    %588 = vmatpush.msra.mxu0 0.0
    %589 = vmatpush.msra.mxu0 0.0
    %590 = vmatpush.msra.mxu0 0.0
    %591 = vmatpush.msra.mxu0 0.0
    %592 = vmatpush.msra.mxu0 0.0
    %593 = vmatpush.msra.mxu0 0.0
    %594 = vmatpush.msra.mxu0 0.0
    %595 = vmatpush.msra.mxu0 0.0
    %596 = vmatpush.msra.mxu0 %v73
    %597 = vmatpush.msra.mxu0 %v72
    %598 = vmatpush.msra.mxu0 %v71
    %599 = vmatpush.msra.mxu0 %v70
    %600 = vmatmul.f32.gmra.mxu0 %v582
    %v601 = vpop.f32.mrf.mxu0
    %v602 = vadd.f32 %v219, %v601
    %603 = vdwg.mxu0
    %604 = vmatpush.msra.mxu0 0.0
    %605 = vmatpush.msra.mxu0 0.0
    %606 = vmatpush.msra.mxu0 0.0
    %607 = vmatpush.msra.mxu0 0.0
    %608 = vmatpush.msra.mxu0 0.0
    %609 = vmatpush.msra.mxu0 0.0
    %610 = vmatpush.msra.mxu0 0.0
    %611 = vmatpush.msra.mxu0 0.0
    %612 = vmatpush.msra.mxu0 0.0
    %613 = vmatpush.msra.mxu0 0.0
    %614 = vmatpush.msra.mxu0 0.0
    %615 = vmatpush.msra.mxu0 0.0
    %616 = vmatpush.msra.mxu0 %v63
    %617 = vmatpush.msra.mxu0 %v62
    %618 = vmatpush.msra.mxu0 %v61
    %619 = vmatpush.msra.mxu0 %v60
    %620 = vmatmul.f32.gmra.mxu0 %v537
    %v621 = vpop.f32.mrf.mxu0
    %v622 = vadd.f32 0.0, %v621
    %623 = vdwg.mxu0
    %v624 = vadd.f32 %v136, %v622
    %v625 = vtanh.pop %v624
    %v627 = vsel %vm144, %v625, 0
    %629 = vmatpush.msra.mxu0 0.0
    %630 = vmatpush.msra.mxu0 0.0
    %631 = vmatpush.msra.mxu0 0.0
    %632 = vmatpush.msra.mxu0 0.0
    %633 = vmatpush.msra.mxu0 0.0
    %634 = vmatpush.msra.mxu0 0.0
    %635 = vmatpush.msra.mxu0 0.0
    %636 = vmatpush.msra.mxu0 0.0
    %637 = vmatpush.msra.mxu0 0.0
    %638 = vmatpush.msra.mxu0 0.0
    %639 = vmatpush.msra.mxu0 0.0
    %640 = vmatpush.msra.mxu0 0.0
    %641 = vmatpush.msra.mxu0 %v59
    %642 = vmatpush.msra.mxu0 %v58
    %643 = vmatpush.msra.mxu0 %v57
    %644 = vmatpush.msra.mxu0 %v56
    %645 = vmatmul.f32.gmra.mxu0 %v627
    %v646 = vpop.f32.mrf.mxu0
    %v647 = vadd.f32 %v171, %v646
    %648 = vdwg.mxu0
    %649 = vmatpush.msra.mxu0 0.0
    %650 = vmatpush.msra.mxu0 0.0
    %651 = vmatpush.msra.mxu0 0.0
    %652 = vmatpush.msra.mxu0 0.0
    %653 = vmatpush.msra.mxu0 0.0
    %654 = vmatpush.msra.mxu0 0.0
    %655 = vmatpush.msra.mxu0 0.0
    %656 = vmatpush.msra.mxu0 0.0
    %657 = vmatpush.msra.mxu0 0.0
    %658 = vmatpush.msra.mxu0 0.0
    %659 = vmatpush.msra.mxu0 0.0
    %660 = vmatpush.msra.mxu0 0.0
    %661 = vmatpush.msra.mxu0 %v67
    %662 = vmatpush.msra.mxu0 %v66
    %663 = vmatpush.msra.mxu0 %v65
    %664 = vmatpush.msra.mxu0 %v64
    %665 = vmatmul.f32.gmra.mxu0 %v582
    %v666 = vpop.f32.mrf.mxu0
    %v667 = vadd.f32 0.0, %v666
    %668 = vdwg.mxu0
    %v669 = vadd.f32 %v647, %v667
    %v670 = vtanh.pop %v669
    %v672 = vsel %vm144, %v670, 0
    %674 = vmatpush.msra.mxu0 0.0
    %675 = vmatpush.msra.mxu0 0.0
    %676 = vmatpush.msra.mxu0 0.0
    %677 = vmatpush.msra.mxu0 0.0
    %678 = vmatpush.msra.mxu0 0.0
    %679 = vmatpush.msra.mxu0 0.0
    %680 = vmatpush.msra.mxu0 0.0
    %681 = vmatpush.msra.mxu0 0.0
    %682 = vmatpush.msra.mxu0 0.0
    %683 = vmatpush.msra.mxu0 0.0
    %684 = vmatpush.msra.mxu0 0.0
    %685 = vmatpush.msra.mxu0 0.0
    %686 = vmatpush.msra.mxu0 %v73
    %687 = vmatpush.msra.mxu0 %v72
    %688 = vmatpush.msra.mxu0 %v71
    %689 = vmatpush.msra.mxu0 %v70
    %690 = vmatmul.f32.gmra.mxu0 %v672
    %v691 = vpop.f32.mrf.mxu0
    %v692 = vadd.f32 %v219, %v691
    %693 = vdwg.mxu0
    %694 = vmatpush.msra.mxu0 0.0
    %695 = vmatpush.msra.mxu0 0.0
    %696 = vmatpush.msra.mxu0 0.0
    %697 = vmatpush.msra.mxu0 0.0
    %698 = vmatpush.msra.mxu0 0.0
    %699 = vmatpush.msra.mxu0 0.0
    %700 = vmatpush.msra.mxu0 0.0
    %701 = vmatpush.msra.mxu0 0.0
    %702 = vmatpush.msra.mxu0 0.0
    %703 = vmatpush.msra.mxu0 0.0
    %704 = vmatpush.msra.mxu0 0.0
    %705 = vmatpush.msra.mxu0 0.0
    %706 = vmatpush.msra.mxu0 %v63
    %707 = vmatpush.msra.mxu0 %v62
    %708 = vmatpush.msra.mxu0 %v61
    %709 = vmatpush.msra.mxu0 %v60
    %710 = vmatmul.f32.gmra.mxu0 %v627
    %v711 = vpop.f32.mrf.mxu0
    %v712 = vadd.f32 0.0, %v711
    %713 = vdwg.mxu0
    %v714 = vadd.f32 %v139, %v712
    %v715 = vtanh.pop %v714
    %v717 = vsel %vm144, %v715, 0
    %719 = vmatpush.msra.mxu0 0.0
    %720 = vmatpush.msra.mxu0 0.0
    %721 = vmatpush.msra.mxu0 0.0
    %722 = vmatpush.msra.mxu0 0.0
    %723 = vmatpush.msra.mxu0 0.0
    %724 = vmatpush.msra.mxu0 0.0
    %725 = vmatpush.msra.mxu0 0.0
    %726 = vmatpush.msra.mxu0 0.0
    %727 = vmatpush.msra.mxu0 0.0
    %728 = vmatpush.msra.mxu0 0.0
    %729 = vmatpush.msra.mxu0 0.0
    %730 = vmatpush.msra.mxu0 0.0
    %731 = vmatpush.msra.mxu0 %v59
    %732 = vmatpush.msra.mxu0 %v58
    %733 = vmatpush.msra.mxu0 %v57
    %734 = vmatpush.msra.mxu0 %v56
    %735 = vmatmul.f32.gmra.mxu0 %v717
    %v736 = vpop.f32.mrf.mxu0
    %v737 = vadd.f32 %v171, %v736
    %738 = vdwg.mxu0
    %739 = vmatpush.msra.mxu0 0.0
    %740 = vmatpush.msra.mxu0 0.0
    %741 = vmatpush.msra.mxu0 0.0
    %742 = vmatpush.msra.mxu0 0.0
    %743 = vmatpush.msra.mxu0 0.0
    %744 = vmatpush.msra.mxu0 0.0
    %745 = vmatpush.msra.mxu0 0.0
    %746 = vmatpush.msra.mxu0 0.0
    %747 = vmatpush.msra.mxu0 0.0
    %748 = vmatpush.msra.mxu0 0.0
    %749 = vmatpush.msra.mxu0 0.0
    %750 = vmatpush.msra.mxu0 0.0
    %751 = vmatpush.msra.mxu0 %v67
    %752 = vmatpush.msra.mxu0 %v66
    %753 = vmatpush.msra.mxu0 %v65
    %754 = vmatpush.msra.mxu0 %v64
    %755 = vmatmul.f32.gmra.mxu0 %v672
    %v756 = vpop.f32.mrf.mxu0
    %v757 = vadd.f32 0.0, %v756
    %758 = vdwg.mxu0
    %v759 = vadd.f32 %v737, %v757
    %v760 = vtanh.pop %v759
    %v762 = vsel %vm144, %v760, 0
    %764 = vmatpush.msra.mxu0 0.0
    %765 = vmatpush.msra.mxu0 0.0
    %766 = vmatpush.msra.mxu0 0.0
    %767 = vmatpush.msra.mxu0 0.0
    %768 = vmatpush.msra.mxu0 0.0
    %769 = vmatpush.msra.mxu0 0.0
    %770 = vmatpush.msra.mxu0 0.0
    %771 = vmatpush.msra.mxu0 0.0
    %772 = vmatpush.msra.mxu0 0.0
    %773 = vmatpush.msra.mxu0 0.0
    %774 = vmatpush.msra.mxu0 0.0
    %775 = vmatpush.msra.mxu0 0.0
    %776 = vmatpush.msra.mxu0 %v73
    %777 = vmatpush.msra.mxu0 %v72
    %778 = vmatpush.msra.mxu0 %v71
    %779 = vmatpush.msra.mxu0 %v70
    %780 = vmatmul.f32.gmra.mxu0 %v762
    %v781 = vpop.f32.mrf.mxu0
    %v782 = vadd.f32 %v219, %v781
    %783 = vdwg.mxu0
    %784 = vmatpush.msra.mxu0 0.0
    %785 = vmatpush.msra.mxu0 0.0
    %786 = vmatpush.msra.mxu0 0.0
    %787 = vmatpush.msra.mxu0 0.0
    %788 = vmatpush.msra.mxu0 0.0
    %789 = vmatpush.msra.mxu0 0.0
    %790 = vmatpush.msra.mxu0 0.0
    %791 = vmatpush.msra.mxu0 0.0
    %792 = vmatpush.msra.mxu0 0.0
    %793 = vmatpush.msra.mxu0 0.0
    %794 = vmatpush.msra.mxu0 0.0
    %795 = vmatpush.msra.mxu0 0.0
    %796 = vmatpush.msra.mxu0 %v63
    %797 = vmatpush.msra.mxu0 %v62
    %798 = vmatpush.msra.mxu0 %v61
    %799 = vmatpush.msra.mxu0 %v60
    %800 = vmatmul.f32.gmra.mxu0 %v717
    %v801 = vpop.f32.mrf.mxu0
    %v802 = vadd.f32 0.0, %v801
    %803 = vdwg.mxu0
    %v804 = vadd.f32 %v142, %v802
    %v805 = vtanh.pop %v804
    %v807 = vsel %vm144, %v805, 0
    %809 = vmatpush.msra.mxu0 0.0
    %810 = vmatpush.msra.mxu0 0.0
    %811 = vmatpush.msra.mxu0 0.0
    %812 = vmatpush.msra.mxu0 0.0
    %813 = vmatpush.msra.mxu0 0.0
    %814 = vmatpush.msra.mxu0 0.0
    %815 = vmatpush.msra.mxu0 0.0
    %816 = vmatpush.msra.mxu0 0.0
    %817 = vmatpush.msra.mxu0 0.0
    %818 = vmatpush.msra.mxu0 0.0
    %819 = vmatpush.msra.mxu0 0.0
    %820 = vmatpush.msra.mxu0 0.0
    %821 = vmatpush.msra.mxu0 %v59
    %822 = vmatpush.msra.mxu0 %v58
    %823 = vmatpush.msra.mxu0 %v57
    %824 = vmatpush.msra.mxu0 %v56
    %825 = vmatmul.f32.gmra.mxu0 %v807
    %v826 = vpop.f32.mrf.mxu0
    %v827 = vadd.f32 %v171, %v826
    %828 = vdwg.mxu0
    %829 = vmatpush.msra.mxu0 0.0
    %830 = vmatpush.msra.mxu0 0.0
    %831 = vmatpush.msra.mxu0 0.0
    %832 = vmatpush.msra.mxu0 0.0
    %833 = vmatpush.msra.mxu0 0.0
    %834 = vmatpush.msra.mxu0 0.0
    %835 = vmatpush.msra.mxu0 0.0
    %836 = vmatpush.msra.mxu0 0.0
    %837 = vmatpush.msra.mxu0 0.0
    %838 = vmatpush.msra.mxu0 0.0
    %839 = vmatpush.msra.mxu0 0.0
    %840 = vmatpush.msra.mxu0 0.0
    %841 = vmatpush.msra.mxu0 %v67
    %842 = vmatpush.msra.mxu0 %v66
    %843 = vmatpush.msra.mxu0 %v65
    %844 = vmatpush.msra.mxu0 %v64
    %845 = vmatmul.f32.gmra.mxu0 %v762
    %v846 = vpop.f32.mrf.mxu0
    %v847 = vadd.f32 0.0, %v846
    %848 = vdwg.mxu0
    %v849 = vadd.f32 %v827, %v847
    %v850 = vtanh.pop %v849
    %v852 = vsel %vm144, %v850, 0
    %854 = vmatpush.msra.mxu0 0.0
    %855 = vmatpush.msra.mxu0 0.0
    %856 = vmatpush.msra.mxu0 0.0
    %857 = vmatpush.msra.mxu0 0.0
    %858 = vmatpush.msra.mxu0 0.0
    %859 = vmatpush.msra.mxu0 0.0
    %860 = vmatpush.msra.mxu0 0.0
    %861 = vmatpush.msra.mxu0 0.0
    %862 = vmatpush.msra.mxu0 0.0
    %863 = vmatpush.msra.mxu0 0.0
    %864 = vmatpush.msra.mxu0 0.0
    %865 = vmatpush.msra.mxu0 0.0
    %866 = vmatpush.msra.mxu0 %v73
    %867 = vmatpush.msra.mxu0 %v72
    %868 = vmatpush.msra.mxu0 %v71
    %869 = vmatpush.msra.mxu0 %v70
    %870 = vmatmul.f32.gmra.mxu0 %v852
    %v871 = vpop.f32.mrf.mxu0
    %v872 = vadd.f32 %v219, %v871
    %873 = vdwg.mxu0
    %v874 = vsel %vm78, %v242, -inf
    %875 = vmax.xlane.f32.xlu0 %v874
    %v876 = vpop.xlane.xlu0 %875
    %v877 = vsel %vm78, %v332, -inf
    %878 = vmax.xlane.f32.xlu0 %v877
    %v879 = vpop.xlane.xlu0 %878
    %v880 = vsel %vm78, %v422, -inf
    %881 = vmax.xlane.f32.xlu0 %v880
    %v882 = vpop.xlane.xlu0 %881
    %v883 = vsel %vm78, %v512, -inf
    %884 = vmax.xlane.f32.xlu0 %v883
    %v885 = vpop.xlane.xlu0 %884
    %v886 = vsel %vm78, %v602, -inf
    %887 = vmax.xlane.f32.xlu0 %v886
    %v888 = vpop.xlane.xlu0 %887
    %v889 = vsel %vm78, %v692, -inf
    %890 = vmax.xlane.f32.xlu0 %v889
    %v891 = vpop.xlane.xlu0 %890
    %v892 = vsel %vm78, %v782, -inf
    %893 = vmax.xlane.f32.xlu0 %v892
    %v894 = vpop.xlane.xlu0 %893
    %v895 = vsel %vm78, %v872, -inf
    %896 = vmax.xlane.f32.xlu0 %v895
    %v897 = vpop.xlane.xlu0 %896
    %v898 = vsub.f32 %v242, %v876
    %v899 = vsub.f32 %v332, %v879
    %v900 = vsub.f32 %v422, %v882
    %v901 = vsub.f32 %v512, %v885
    %v902 = vsub.f32 %v602, %v888
    %v903 = vsub.f32 %v692, %v891
    %v904 = vsub.f32 %v782, %v894
    %v905 = vsub.f32 %v872, %v897
    %v906 = vmul.f32 %v898, 1.442695
    %v907 = vpow.pop %v906
    %v908 = vmul.f32 %v899, 1.442695
    %v909 = vpow.pop %v908
    %v910 = vmul.f32 %v900, 1.442695
    %v911 = vpow.pop %v910
    %v912 = vmul.f32 %v901, 1.442695
    %v913 = vpow.pop %v912
    %v914 = vmul.f32 %v902, 1.442695
    %v915 = vpow.pop %v914
    %v916 = vmul.f32 %v903, 1.442695
    %v917 = vpow.pop %v916
    %v918 = vmul.f32 %v904, 1.442695
    %v919 = vpow.pop %v918
    %v920 = vmul.f32 %v905, 1.442695
    %v921 = vpow.pop %v920
    %v922 = vsel %vm78, %v907, 0.0
    %923 = vadd.xlane.f32.xlu0 %v922
    %v924 = vpop.xlane.xlu0 %923
    %v925 = vsel %vm78, %v909, 0.0
    %926 = vadd.xlane.f32.xlu0 %v925
    %v927 = vpop.xlane.xlu0 %926
    %v928 = vsel %vm78, %v911, 0.0
    %929 = vadd.xlane.f32.xlu0 %v928
    %v930 = vpop.xlane.xlu0 %929
    %v931 = vsel %vm78, %v913, 0.0
    %932 = vadd.xlane.f32.xlu0 %v931
    %v933 = vpop.xlane.xlu0 %932
    %v934 = vsel %vm78, %v915, 0.0
    %935 = vadd.xlane.f32.xlu0 %v934
    %v936 = vpop.xlane.xlu0 %935
    %v937 = vsel %vm78, %v917, 0.0
    %938 = vadd.xlane.f32.xlu0 %v937
    %v939 = vpop.xlane.xlu0 %938
    %v940 = vsel %vm78, %v919, 0.0
    %941 = vadd.xlane.f32.xlu0 %v940
    %v942 = vpop.xlane.xlu0 %941
    %v943 = vsel %vm78, %v921, 0.0
    %944 = vadd.xlane.f32.xlu0 %v943
    %v945 = vpop.xlane.xlu0 %944
    %v946 = vlog2.pop %v924
    %v947 = vmul.f32 %v946, 0.6931472
    %v948 = vlog2.pop %v927
    %v949 = vmul.f32 %v948, 0.6931472
    %v950 = vlog2.pop %v930
    %v951 = vmul.f32 %v950, 0.6931472
    %v952 = vlog2.pop %v933
    %v953 = vmul.f32 %v952, 0.6931472
    %v954 = vlog2.pop %v936
    %v955 = vmul.f32 %v954, 0.6931472
    %v956 = vlog2.pop %v939
    %v957 = vmul.f32 %v956, 0.6931472
    %v958 = vlog2.pop %v942
    %v959 = vmul.f32 %v958, 0.6931472
    %v960 = vlog2.pop %v945
    %v961 = vmul.f32 %v960, 0.6931472
    %v962 = vsub.f32 %v898, %v947
    %v963 = vsub.f32 %v899, %v949
    %v964 = vsub.f32 %v900, %v951
    %v965 = vsub.f32 %v901, %v953
    %v966 = vsub.f32 %v902, %v955
    %v967 = vsub.f32 %v903, %v957
    %v968 = vsub.f32 %v904, %v959
    %v969 = vsub.f32 %v905, %v961
    %970 = vst.msk [vmem:[%s9] sm:$0xff] %vm78, %v962
    %971 = vst.msk [vmem:[%s9 + $0x8] sm:$0xff] %vm78, %v963
    %972 = vst.msk [vmem:[%s9 + $0x10] sm:$0xff] %vm78, %v964
    %973 = vst.msk [vmem:[%s9 + $0x18] sm:$0xff] %vm78, %v965
    %974 = vst.msk [vmem:[%s9 + $0x20] sm:$0xff] %vm78, %v966
    %975 = vst.msk [vmem:[%s9 + $0x28] sm:$0xff] %vm78, %v967
    %976 = vst.msk [vmem:[%s9 + $0x30] sm:$0xff] %vm78, %v968
    %977 = vst.msk [vmem:[%s9 + $0x38] sm:$0xff] %vm78, %v969
    // Predicated region
    $region42: #{recurrent_model_forward.1} parent=1 // pred_check
      _
    $region43: #{recurrent_model_forward.1} parent=1 // pred_check_branch
      %979 = sbr.rel (0) target = $region45
    $region44: #{recurrent_model_forward.1} parent=1 // pred_region
      _
    $region45: #{recurrent_model_forward.1} parent=1 // pred_fallthru
      _
    // Predicated region
    $region46: #{recurrent_model_forward.1} parent=1 // pred_check
      _
    $region47: #{recurrent_model_forward.1} parent=1 // pred_check_branch
      %981 = sbr.rel (0) target = $region49
    $region48: #{recurrent_model_forward.1} parent=1 // pred_region
      _
    $region49: #{recurrent_model_forward.1} parent=1 // pred_fallthru
      _
    %982 = vsyncpa [#allocation3], 1

</llo_original>
